<compile_context>
chip_gen: v6e
topology: v6e:2x2x1
jax: 0.10.0
libtpu: 0.0.40
codegen_flags: <defaults>
</compile_context>

<pallas_src>
import functools
import math
from types import SimpleNamespace

import jax
import jax.numpy as jnp
from jax import lax
from jax.experimental import pallas as pl
from jax.experimental.pallas import tpu as pltpu

# ------------------------- tiling / compiler helpers -------------------------

ROW_TILE = 2048   # row tile for the mem-bound, feature<=32 kernels (mult. of SIM_TILE)
SIM_TILE = 256    # query/key tile for the fused minsg InfoNCE kernel
K_TILE = 512      # contraction (node) tile for the recon decoder

_VMEM_LIMIT_BYTES = 32 * 1024 * 1024


def _cparams(*semantics):
    return pltpu.CompilerParams(dimension_semantics=semantics,
                                vmem_limit_bytes=_VMEM_LIMIT_BYTES)


def _choose_tile(n, target):
    # Block either equals the full dim (small arrays) or a fixed (8,128)-
    # friendly tile (large arrays).
    return n if n <= target else target


def _cdiv(a, b):
    return -(-a // b)


# ----------------------------- Pallas kernels ------------------------------

def _link_hidden_kernel(x_ref, w_ref, b_ref, o_ref):
    # relu( l2_normalize(x, eps=1e-12) @ W + b ); W pre-transposed, bf16.
    x = x_ref[...].astype(jnp.float32)
    inv = lax.rsqrt(jnp.maximum(jnp.sum(x * x, axis=-1, keepdims=True), 1e-24))
    xn = (x * inv).astype(jnp.bfloat16)
    y = jnp.dot(xn, w_ref[...], preferred_element_type=jnp.float32) + b_ref[...]
    o_ref[...] = jnp.maximum(y, 0.0)


def _minsg_mlp_kernel(x_ref, w0_ref, b0_ref, w1_ref, b1_ref, o_ref, *, n_valid, tile):
    # Fused 2-layer MLP (Linear->ReLU->Linear) + row L2-normalization.
    # Rows >= n_valid are written as exact zeros (so the InfoNCE kernel can
    # consume the padded slab without NaN risk).
    # TODO(synk): utils.sim_matrix is external; assumed cosine sim.
    i = pl.program_id(0)
    x = x_ref[...].astype(jnp.bfloat16)
    h = jnp.dot(x, w0_ref[...], preferred_element_type=jnp.float32) + b0_ref[...]
    h = jnp.maximum(h, 0.0).astype(jnp.bfloat16)
    y = jnp.dot(h, w1_ref[...], preferred_element_type=jnp.float32) + b1_ref[...]
    inv = lax.rsqrt(jnp.maximum(jnp.sum(y * y, axis=-1, keepdims=True), 1e-16))
    row = i * tile + lax.broadcasted_iota(jnp.int32, (tile, 1), 0)
    o_ref[...] = jnp.where(row < n_valid, y * inv, 0.0)


def _link_bce_kernel(xu_ref, xv_ref, w_ref, b_ref, pos_ref, neg_ref,
                     *, n_pos, n_rows, tile):
    # Fused edge product + per-row logit + BCE; accumulates pos/neg sums.
    i = pl.program_id(0)

    @pl.when(i == 0)
    def _():
        pos_ref[...] = jnp.zeros_like(pos_ref)
        neg_ref[...] = jnp.zeros_like(neg_ref)

    xu = xu_ref[...].astype(jnp.float32)
    xv = xv_ref[...].astype(jnp.float32)
    logit = jnp.sum(xu * xv * w_ref[...], axis=-1, keepdims=True) + b_ref[...]
    p = 1.0 / (1.0 + jnp.exp(-logit))
    logp = jnp.maximum(jnp.log(p), -100.0)         # torch BCE log clamp
    log1mp = jnp.maximum(jnp.log(1.0 - p), -100.0)

    row = i * tile + lax.broadcasted_iota(jnp.int32, (tile, 1), 0)
    is_pos = row < n_pos
    valid = row < n_rows
    bce = jnp.where(is_pos, -logp, -log1mp)
    bce = jnp.where(valid, bce, 0.0)
    pos_ref[...] += jnp.sum(jnp.where(is_pos, bce, 0.0))
    neg_ref[...] += jnp.sum(jnp.where(is_pos, 0.0, bce))


def _ming_bce_kernel(x_ref, v_ref, out_ref, *, n_rows, target_one, tile):
    # Per-row logit = <x, v> ; sigmoid ; BCE against a constant target;
    # accumulated to a single scalar in VMEM.
    i = pl.program_id(0)

    @pl.when(i == 0)
    def _():
        out_ref[...] = jnp.zeros_like(out_ref)

    x = x_ref[...].astype(jnp.float32)
    logit = jnp.sum(x * v_ref[...], axis=-1, keepdims=True)
    p = 1.0 / (1.0 + jnp.exp(-logit))
    if target_one:
        bce = -jnp.maximum(jnp.log(p), -100.0)
    else:
        bce = -jnp.maximum(jnp.log(1.0 - p), -100.0)
    row = i * tile + lax.broadcasted_iota(jnp.int32, (tile, 1), 0)
    out_ref[...] += jnp.sum(jnp.where(row < n_rows, bce, 0.0))


def _minsg_fused_kernel(aq_ref, bq_ref, ak_ref, bk_ref, s_ref, a2_ref,
                        acc1_ref, acc2_ref, *, inv_temp, n_valid, tile):
    # Flash-style fused bidirectional InfoNCE: computes exp(h1.h1^T/T),
    # exp(h2.h2^T/T) and exp(h1.h2^T/T) ONCE per block (3*N^2 exps total).
    # Direction-1 loss is reduced to the scalar s_ref; direction-2 partial
    # sums (refl2 + between2, lane-dense) land in a2_ref and are finished in
    # the wrapper.  1/T is folded into the query tiles; diagonals come from
    # direct row-wise dots.
    qi = pl.program_id(0)
    kj = pl.program_id(1)
    nk = pl.num_programs(1)

    @pl.when((qi == 0) & (kj == 0))
    def _():
        s_ref[...] = jnp.zeros_like(s_ref)
        a2_ref[...] = jnp.zeros_like(a2_ref)

    @pl.when(kj == 0)
    def _():
        acc1_ref[...] = jnp.zeros_like(acc1_ref)
        acc2_ref[...] = jnp.zeros_like(acc2_ref)

    aq = aq_ref[...] * inv_temp                       # f32 (tile, H)
    bq = bq_ref[...] * inv_temp
    aqb = aq.astype(jnp.bfloat16)
    bqb = bq.astype(jnp.bfloat16)
    akb = ak_ref[...].astype(jnp.bfloat16)
    bkb = bk_ref[...].astype(jnp.bfloat16)

    q_rows = qi * tile + lax.broadcasted_iota(jnp.int32, (tile, 1), 0)
    k_cols = kj * tile + lax.broadcasted_iota(jnp.int32, (1, tile), 1)
    k_rows = kj * tile + lax.broadcasted_iota(jnp.int32, (tile, 1), 0)
    q_valid = q_rows < n_valid
    k_valid_c = k_cols < n_valid
    k_valid_r = k_rows < n_valid

    dims = (((1,), (1,)), ((), ()))
    e_aa = jnp.where(k_valid_c,
                     jnp.exp(lax.dot_general(aqb, akb, dims,
                                             preferred_element_type=jnp.float32)),
                     0.0)
    e_ab = jnp.where(jnp.logical_and(q_valid, k_valid_c),
                     jnp.exp(lax.dot_general(aqb, bkb, dims,
                                             preferred_element_type=jnp.float32)),
                     0.0)
    # transposed block of exp(h2.h2^T/T): row = key index, col = query index,
    # so the refl2 accumulator stays lane-dense (no in-kernel transpose).
    e_bbT = jnp.where(k_valid_r,
                      jnp.exp(lax.dot_general(bkb, bqb, dims,
                                              preferred_element_type=jnp.float32)),
                      0.0)

    acc1_ref[...] += (jnp.sum(e_aa, axis=1, keepdims=True) +
                      jnp.sum(e_ab, axis=1, keepdims=True))
    acc2_ref[...] += jnp.sum(e_bbT, axis=0, keepdims=True)
    # direction-2 "between" column sums, indexed by the key tile kj.
    a2_ref[pl.ds(kj, 1), :] = (a2_ref[pl.ds(kj, 1), :] +
                               jnp.sum(e_ab, axis=0, keepdims=True))

    @pl.when(kj == nk - 1)
    def _():
        d_log = jnp.sum(aq * bq_ref[...], axis=1, keepdims=True)           # <h1,h2>/T
        dref1 = jnp.exp(jnp.sum(aq * aq_ref[...], axis=1, keepdims=True))  # exp(<h1,h1>/T)
        a1 = jnp.maximum(acc1_ref[...] - dref1, 1e-30)
        contrib = jnp.where(q_valid, 0.5 * jnp.log(a1) - d_log, 0.0)
        s_ref[...] += jnp.sum(contrib)
        a2_ref[pl.ds(qi, 1), :] = a2_ref[pl.ds(qi, 1), :] + acc2_ref[...]


def _decor_stats_kernel(h1_ref, h2_ref, st_ref, g1_ref, g2_ref,
                        *, n_valid, tile, nhalf):
    # Single HBM pass: column sums / sums-of-squares / cross sums + raw Grams.
    # Leading grid axis p (size 2) gives each v7x TensorCore its own partial
    # accumulators; they are combined in XLA.
    p = pl.program_id(0)
    i = pl.program_id(1)

    @pl.when(i == 0)
    def _():
        st_ref[...] = jnp.zeros_like(st_ref)
        g1_ref[...] = jnp.zeros_like(g1_ref)
        g2_ref[...] = jnp.zeros_like(g2_ref)

    row = (p * nhalf + i) * tile + lax.broadcasted_iota(jnp.int32, (tile, 1), 0)
    valid = row < n_valid
    h1 = jnp.where(valid, h1_ref[...].astype(jnp.float32), 0.0)
    h2 = jnp.where(valid, h2_ref[...].astype(jnp.float32), 0.0)

    st_ref[0:1, :] += jnp.sum(h1, axis=0, keepdims=True)
    st_ref[1:2, :] += jnp.sum(h1 * h1, axis=0, keepdims=True)
    st_ref[2:3, :] += jnp.sum(h2, axis=0, keepdims=True)
    st_ref[3:4, :] += jnp.sum(h2 * h2, axis=0, keepdims=True)
    st_ref[4:5, :] += jnp.sum(h1 * h2, axis=0, keepdims=True)

    dims = (((0,), (0,)), ((), ()))
    # bf16 Gram (f32 accumulation); the mean/std correction happens in XLA.
    h1b = h1.astype(jnp.bfloat16)
    h2b = h2.astype(jnp.bfloat16)
    g1_ref[...] += lax.dot_general(h1b, h1b, dims, preferred_element_type=jnp.float32)
    g2_ref[...] += lax.dot_general(h2b, h2b, dims, preferred_element_type=jnp.float32)


def _recon_encode_kernel(x_ref, keep_ref, w_ref, o_ref, *, n_valid, tile):
    # h_enc = (x @ W_recon^T), masked-node rows zeroed, emitted in bf16;
    # rows >= n_valid are exact zeros (padded slab for the decoder).
    i = pl.program_id(0)
    x = x_ref[...].astype(jnp.bfloat16)
    y = jnp.dot(x, w_ref[...], preferred_element_type=jnp.float32)
    row = i * tile + lax.broadcasted_iota(jnp.int32, (tile, 1), 0)
    y = jnp.where(row < n_valid, y * keep_ref[...], 0.0)
    o_ref[...] = y.astype(o_ref.dtype)


def _recon_decode_sce_kernel(a_ref, h_ref, w_ref, b_ref, xt_ref, o_ref, acc_ref,
                             *, n_cols, m_rows, tile_m, tile_k):
    # Fused (a_hat[mask] @ h_enc) @ W_dec^T + b  ->  per-row (1-cos)^3,
    # reduced to a single scalar sum.
    i = pl.program_id(0)
    k = pl.program_id(1)

    @pl.when((i == 0) & (k == 0))
    def _():
        o_ref[...] = jnp.zeros_like(o_ref)

    @pl.when(k == 0)
    def _():
        acc_ref[...] = jnp.zeros_like(acc_ref)

    col = k * tile_k + lax.broadcasted_iota(jnp.int32, (1, tile_k), 1)
    a = a_ref[...]
    a = jnp.where(col < n_cols, a, jnp.zeros_like(a))          # guard ragged tail
    acc_ref[...] += jnp.dot(a, h_ref[...], preferred_element_type=jnp.float32)

    @pl.when(k == pl.num_programs(1) - 1)
    def _():
        xp = jnp.dot(acc_ref[...].astype(jnp.bfloat16), w_ref[...],
                     preferred_element_type=jnp.float32) + b_ref[...]
        xt = xt_ref[...].astype(jnp.float32)
        xpn = xp * lax.rsqrt(jnp.maximum(jnp.sum(xp * xp, -1, keepdims=True), 1e-24))
        xtn = xt * lax.rsqrt(jnp.maximum(jnp.sum(xt * xt, -1, keepdims=True), 1e-24))
        t = 1.0 - jnp.sum(xpn * xtn, axis=-1, keepdims=True)
        row = i * tile_m + lax.broadcasted_iota(jnp.int32, (tile_m, 1), 0)
        o_ref[...] += jnp.sum(jnp.where(row < m_rows, t * t * t, 0.0))


# ----------------------------- Pallas wrappers ------------------------------

def _pallas_link_bce_sums(xu, xv, w_row, b_11, n_pos):
    rows, d = xu.shape
    t = _choose_tile(rows, ROW_TILE)
    grid = (_cdiv(rows, t),)
    kern = functools.partial(_link_bce_kernel, n_pos=n_pos, n_rows=rows, tile=t)
    pos, neg = pl.pallas_call(
        kern,
        out_shape=[jax.ShapeDtypeStruct((1, 1), jnp.float32)] * 2,
        grid=grid,
        in_specs=[pl.BlockSpec((t, d), lambda i: (i, 0)),
                  pl.BlockSpec((t, d), lambda i: (i, 0)),
                  pl.BlockSpec((1, d), lambda i: (0, 0)),
                  pl.BlockSpec((1, 1), lambda i: (0, 0))],
        out_specs=[pl.BlockSpec((1, 1), lambda i: (0, 0))] * 2,
        compiler_params=_cparams("arbitrary"),
    )(xu, xv, w_row, b_11)
    return pos[0, 0], neg[0, 0]


def _pallas_ming_bce_sum(x, v_row, target_one):
    rows, d = x.shape
    t = _choose_tile(rows, ROW_TILE)
    grid = (_cdiv(rows, t),)
    kern = functools.partial(_ming_bce_kernel, n_rows=rows, tile=t,
                             target_one=target_one)
    out = pl.pallas_call(
        kern,
        out_shape=jax.ShapeDtypeStruct((1, 1), jnp.float32),
        grid=grid,
        in_specs=[pl.BlockSpec((t, d), lambda i: (i, 0)),
                  pl.BlockSpec((1, d), lambda i: (0, 0))],
        out_specs=pl.BlockSpec((1, 1), lambda i: (0, 0)),
        compiler_params=_cparams("arbitrary"),
    )(x, v_row)
    return out[0, 0]


def _pallas_minsg_fused(h1, h2, temperature, n_valid, tile):
    npad, hid = h1.shape
    nt = npad // tile
    kern = functools.partial(_minsg_fused_kernel,
                             inv_temp=1.0 / float(temperature),
                             n_valid=n_valid, tile=tile)
    s, a2 = pl.pallas_call(
        kern,
        out_shape=[jax.ShapeDtypeStruct((1, 1), jnp.float32),
                   jax.ShapeDtypeStruct((nt, tile), jnp.float32)],
        grid=(nt, nt),
        in_specs=[pl.BlockSpec((tile, hid), lambda i, j: (i, 0)),
                  pl.BlockSpec((tile, hid), lambda i, j: (i, 0)),
                  pl.BlockSpec((tile, hid), lambda i, j: (j, 0)),
                  pl.BlockSpec((tile, hid), lambda i, j: (j, 0))],
        out_specs=[pl.BlockSpec((1, 1), lambda i, j: (0, 0)),
                   pl.BlockSpec((nt, tile), lambda i, j: (0, 0))],
        scratch_shapes=[pltpu.VMEM((tile, 1), jnp.float32),
                        pltpu.VMEM((1, tile), jnp.float32)],
        compiler_params=_cparams("arbitrary", "arbitrary"),
    )(h1, h2, h1, h2)
    return s, a2


# ------------------------------ the module ----------------------------------

class PretrainModule:
    def __init__(self, hid_dim, predictor_dim, in_feats, key):
        self.hid_dim = hid_dim
        self.predictor_dim = predictor_dim
        self.in_feats = in_feats
        ks = list(jax.random.split(key, 12))

        def xavier(k, out_f, in_f):  # torch.nn.init.xavier_uniform_
            a = math.sqrt(6.0 / (in_f + out_f))
            return jax.random.uniform(k, (out_f, in_f), jnp.float32, -a, a)

        # link predictor (weights pre-transposed / pre-cast once at init)
        W_link_hid = xavier(ks[0], predictor_dim, hid_dim)
        self.W_link_hid_T = jnp.transpose(W_link_hid).astype(jnp.bfloat16)
        self.b_link_hid_row = jnp.zeros((1, predictor_dim), jnp.float32)
        W_link_cls = xavier(ks[1], 1, predictor_dim)
        self.w_link_cls_row = W_link_cls.reshape(1, predictor_dim)
        self.b_link_cls_11 = jnp.zeros((1, 1), jnp.float32)
        # graph_matcher / metis_cls / par_cls / decor MLP exist in __init__ but
        # are never used by forward(); kept only for parameter parity.
        self.W_gm0 = xavier(ks[2], predictor_dim, hid_dim)
        self.W_gm1 = xavier(ks[3], hid_dim, predictor_dim)
        self.W_metis = xavier(ks[4], 10, hid_dim)
        self.W_par = xavier(ks[5], 20, hid_dim)
        # Discriminator: U(-1/sqrt(H), 1/sqrt(H))
        bound = 1.0 / math.sqrt(hid_dim)
        self.W_disc = jax.random.uniform(ks[6], (hid_dim, hid_dim),
                                         jnp.float32, -bound, bound)
        # minsg MLP
        W_minsg0 = xavier(ks[7], predictor_dim, hid_dim)
        self.W_minsg0_T = jnp.transpose(W_minsg0).astype(jnp.bfloat16)
        self.b_minsg0_row = jnp.zeros((1, predictor_dim), jnp.float32)
        W_minsg1 = xavier(ks[8], hid_dim, predictor_dim)
        self.W_minsg1_T = jnp.transpose(W_minsg1).astype(jnp.bfloat16)
        self.b_minsg1_row = jnp.zeros((1, hid_dim), jnp.float32)
        self.W_decor0 = xavier(ks[9], predictor_dim, hid_dim)
        self.W_decor1 = xavier(ks[10], hid_dim, predictor_dim)
        # reconstruction head
        self.recon_mask = jnp.zeros((1, in_feats), jnp.float32)
        k_a, k_b = jax.random.split(ks[11])
        W_recon = xavier(k_a, hid_dim, hid_dim)       # recon_enc_dec (no bias)
        self.W_recon_T = jnp.transpose(W_recon).astype(jnp.bfloat16)
        W_dec = xavier(k_b, in_feats, hid_dim)        # GraphConv(hid, in_feats)
        self.W_dec_T = jnp.transpose(W_dec).astype(jnp.bfloat16)
        self.b_dec_row = jnp.zeros((1, in_feats), jnp.float32)

    # ---- small fused building blocks ----

    def _link_hidden(self, h):
        n, hid = h.shape
        p = self.predictor_dim
        t = _choose_tile(n, ROW_TILE)
        out = pl.pallas_call(
            _link_hidden_kernel,
            out_shape=jax.ShapeDtypeStruct((n, p), jnp.float32),
            grid=(_cdiv(n, t),),
            in_specs=[pl.BlockSpec((t, hid), lambda i: (i, 0)),
                      pl.BlockSpec((hid, p), lambda i: (0, 0)),
                      pl.BlockSpec((1, p), lambda i: (0, 0))],
            out_specs=pl.BlockSpec((t, p), lambda i: (i, 0)),
            compiler_params=_cparams("parallel"),
        )(h, self.W_link_hid_T, self.b_link_hid_row)
        return out

    def _minsg_mlp(self, x, out_rows):
        n, hid = x.shape
        p = self.predictor_dim
        t = _choose_tile(out_rows, ROW_TILE)
        kern = functools.partial(_minsg_mlp_kernel, n_valid=n, tile=t)
        out = pl.pallas_call(
            kern,
            out_shape=jax.ShapeDtypeStruct((out_rows, hid), jnp.float32),
            grid=(_cdiv(out_rows, t),),
            in_specs=[pl.BlockSpec((t, hid), lambda i: (i, 0)),
                      pl.BlockSpec((hid, p), lambda i: (0, 0)),
                      pl.BlockSpec((1, p), lambda i: (0, 0)),
                      pl.BlockSpec((p, hid), lambda i: (0, 0)),
                      pl.BlockSpec((1, hid), lambda i: (0, 0))],
            out_specs=pl.BlockSpec((t, hid), lambda i: (i, 0)),
            compiler_params=_cparams("parallel"),
        )(x, self.W_minsg0_T, self.b_minsg0_row,
          self.W_minsg1_T, self.b_minsg1_row)
        return out

    # ---- loss heads ----

    def p_link(self, h, pos_u, pos_v, neg_u, neg_v):
        # TODO(synk): big_model(sg) is an external GNN; `h` is its precomputed output.
        hh = self._link_hidden(h)                        # (N, predictor_dim)
        # TODO(synk): a PrefetchScalarGridSpec row-gather kernel could stream
        # hh rows straight from HBM; the two gathers below are single XLA ops,
        # product / BCE / reduction are fused in-kernel.
        u_idx = jnp.concatenate([pos_u, neg_u], axis=0)
        v_idx = jnp.concatenate([pos_v, neg_v], axis=0)
        xu = hh[u_idx]
        xv = hh[v_idx]
        n_pos = pos_u.shape[0]
        pos_sum, neg_sum = _pallas_link_bce_sums(
            xu, xv, self.w_link_cls_row, self.b_link_cls_11, n_pos=n_pos)
        return (pos_sum + neg_sum) / xu.shape[0]

    def p_ming(self, positive, negative):
        # TODO(synk): big_model(bg, feat)/big_model(bg, cor_feat) are external;
        # `positive`/`negative` are their precomputed outputs.
        n_pos = positive.shape[0]
        n_neg = negative.shape[0]
        summary = jax.nn.sigmoid(jnp.mean(positive.astype(jnp.float32), axis=0))
        v = jnp.dot(self.W_disc, summary).reshape(1, -1)          # hoisted once
        l1 = _pallas_ming_bce_sum(positive, v, target_one=True) / n_pos
        l2 = _pallas_ming_bce_sum(negative, v, target_one=False) / n_neg
        return l1 + l2

    def p_minsg(self, e1, e2, temperature):
        # TODO(synk): big_model(g1, feat1)/big_model(g2, feat2) are external;
        # e1/e2 are their precomputed outputs.
        n = e1.shape[0]
        t = _choose_tile(n, SIM_TILE)
        npad = _cdiv(n, t) * t
        h1 = self._minsg_mlp(e1, out_rows=npad)     # normalized, zero-padded
        h2 = self._minsg_mlp(e2, out_rows=npad)
        s, a2 = _pallas_minsg_fused(h1, h2, temperature, n_valid=n, tile=t)
        inv_t = 1.0 / float(temperature)
        # direction-2 reflexive diagonal handled here (tiny O(n*H) XLA op).
        dref2 = jnp.exp(inv_t * jnp.sum(h2[:n] * h2[:n], axis=-1))
        a2v = jnp.maximum(a2.reshape(-1)[:n] - dref2, 1e-30)
        total = s[0, 0] + 0.5 * jnp.sum(jnp.log(a2v))
        return total / n

    def p_decor(self, h1, h2, lambd=0.001):
        # TODO(synk): big_model(g, g.ndata['feat']) is external; h1/h2 precomputed.
        n, hid = h1.shape
        t = _choose_tile(n, ROW_TILE)
        nblk = _cdiv(n, t)
        nhalf = _cdiv(nblk, 2)

        def in_idx(p, i):
            return (jnp.minimum(p * nhalf + i, nblk - 1), 0)

        kern = functools.partial(_decor_stats_kernel, n_valid=n, tile=t,
                                 nhalf=nhalf)
        stats, g1, g2 = pl.pallas_call(
            kern,
            out_shape=[jax.ShapeDtypeStruct((2 * 8, hid), jnp.float32),
                       jax.ShapeDtypeStruct((2 * hid, hid), jnp.float32),
                       jax.ShapeDtypeStruct((2 * hid, hid), jnp.float32)],
            grid=(2, nhalf),
            in_specs=[pl.BlockSpec((t, hid), in_idx),
                      pl.BlockSpec((t, hid), in_idx)],
            out_specs=[pl.BlockSpec((8, hid), lambda p, i: (p, 0)),
                       pl.BlockSpec((hid, hid), lambda p, i: (p, 0)),
                       pl.BlockSpec((hid, hid), lambda p, i: (p, 0))],
            compiler_params=_cparams("parallel", "arbitrary"),
        )(h1, h2)

        st = stats[:8] + stats[8:]
        G1 = g1[:hid] + g1[hid:]
        G2 = g2[:hid] + g2[hid:]
        s1, q1, s2, q2, pc = st[0], st[1], st[2], st[3], st[4]
        nn = float(n)
        mu1 = s1 / nn
        mu2 = s2 / nn
        # torch std is unbiased (ddof=1); no eps, matching torch behaviour.
        var1 = (q1 - nn * mu1 * mu1) / (nn - 1.0)
        var2 = (q2 - nn * mu2 * mu2) / (nn - 1.0)
        std1 = jnp.sqrt(var1)
        std2 = jnp.sqrt(var2)
        c1 = (G1 - nn * jnp.outer(mu1, mu1)) / (nn * jnp.outer(std1, std1))
        c2 = (G2 - nn * jnp.outer(mu2, mu2)) / (nn * jnp.outer(std2, std2))
        cross = jnp.sum((pc - nn * mu1 * mu2) / (std1 * std2))
        # ||z1 - z2||_F^2 = sum(z1^2) + sum(z2^2) - 2 sum(z1*z2), with
        # sum(z^2) == (n-1)*hid exactly under the ddof=1 standardization.
        sq = jnp.maximum(2.0 * (nn - 1.0) * hid - 2.0 * cross, 0.0)
        loss_inv = jnp.sqrt(sq) / nn
        iden = jnp.eye(hid, dtype=jnp.float32)
        loss_dec1 = jnp.sqrt(jnp.sum((iden - c1) ** 2))
        loss_dec2 = jnp.sqrt(jnp.sum((iden - c2) ** 2))
        return loss_inv + lambd * (loss_dec1 + loss_dec2)

    def p_recon(self, h, a_hat, mask_nodes, x_target):
        # TODO(synk): the masked-feature construction (recon_mask add) and the
        # big_model encoder are external; `h` is the precomputed encoder output.
        # TODO(synk): dgl.GraphConv aggregation is represented by the caller-
        # supplied symmetrically-normalized dense adjacency a_hat.
        n, hid = h.shape
        m = mask_nodes.shape[0]
        in_feats = x_target.shape[1]
        tk = _choose_tile(n, K_TILE)
        nk = _cdiv(n, tk)
        npad_k = nk * tk

        keep = jnp.ones((n, 1), jnp.float32).at[mask_nodes].set(0.0)
        enc_kern = functools.partial(_recon_encode_kernel, n_valid=n, tile=tk)
        h_enc = pl.pallas_call(
            enc_kern,
            out_shape=jax.ShapeDtypeStruct((npad_k, hid), jnp.bfloat16),
            grid=(nk,),
            in_specs=[pl.BlockSpec((tk, hid), lambda i: (i, 0)),
                      pl.BlockSpec((tk, 1), lambda i: (i, 0)),
                      pl.BlockSpec((hid, hid), lambda i: (0, 0))],
            out_specs=pl.BlockSpec((tk, hid), lambda i: (i, 0)),
            compiler_params=_cparams("parallel"),
        )(h, keep, self.W_recon_T)

        # TODO(synk): a scalar-prefetch gather kernel could stream a_hat rows
        # from HBM without this XLA gather; only the masked rows are touched.
        a_sub = a_hat[mask_nodes].astype(jnp.bfloat16)          # (m, n)
        tm = _choose_tile(m, ROW_TILE)
        mt = _cdiv(m, tm)
        dec_kern = functools.partial(_recon_decode_sce_kernel,
                                     n_cols=n, m_rows=m, tile_m=tm, tile_k=tk)
        total = pl.pallas_call(
            dec_kern,
            out_shape=jax.ShapeDtypeStruct((1, 1), jnp.float32),
            grid=(mt, nk),
            in_specs=[pl.BlockSpec((tm, tk), lambda i, k: (i, k)),
                      pl.BlockSpec((tk, hid), lambda i, k: (k, 0)),
                      pl.BlockSpec((hid, in_feats), lambda i, k: (0, 0)),
                      pl.BlockSpec((1, in_feats), lambda i, k: (0, 0)),
                      pl.BlockSpec((tm, in_feats), lambda i, k: (i, 0))],
            out_specs=pl.BlockSpec((1, 1), lambda i, k: (0, 0)),
            scratch_shapes=[pltpu.VMEM((tm, hid), jnp.float32)],
            compiler_params=_cparams("arbitrary", "arbitrary"),
        )(a_sub, h_enc, self.W_dec_T, self.b_dec_row, x_target)
        return total[0, 0] / m

    # ---- forward ----

    def forward(self, sample, opt):
        res = {}
        if 'p_link' in sample:
            d = sample['p_link']
            res['p_link'] = self.p_link(d[0], d[1], d[2], d[3], d[4])
        if 'p_ming' in sample:
            d = sample['p_ming']
            res['p_ming'] = self.p_ming(d[0], d[1])
        if 'p_minsg' in sample:
            d = sample['p_minsg']
            res['p_minsg'] = self.p_minsg(d[0], d[1],
                                          temperature=opt.temperature_minsg)
        if 'p_decor' in sample:
            d = sample['p_decor']
            res['p_decor'] = self.p_decor(d[0], d[1], lambd=opt.decor_lamb)
        if 'p_recon' in sample:
            d = sample['p_recon']
            res['p_recon'] = self.p_recon(d[0], d[1], d[2], d[3])
        return res


# --------------------------------- demo -------------------------------------

if __name__ == "__main__":
    hid_dim, predictor_dim, in_feats = 32, 16, 8
    n_nodes, n_edges = 16, 8

    key = jax.random.PRNGKey(0)
    k_par, k_in = jax.random.split(key)
    model = PretrainModule(hid_dim, predictor_dim, in_feats, k_par)

    ks = jax.random.split(k_in, 12)
    h_link = jax.random.normal(ks[0], (n_nodes, hid_dim), jnp.float32)
    pos_u = jax.random.randint(ks[1], (n_edges,), 0, n_nodes)
    pos_v = jax.random.randint(ks[2], (n_edges,), 0, n_nodes)
    neg_u = jax.random.randint(ks[3], (n_edges,), 0, n_nodes)
    neg_v = jax.random.randint(ks[4], (n_edges,), 0, n_nodes)
    pos_emb = jax.random.normal(ks[5], (n_nodes, hid_dim), jnp.float32)
    neg_emb = jax.random.normal(ks[6], (n_nodes, hid_dim), jnp.float32)
    h1_minsg = jax.random.normal(ks[7], (n_nodes, hid_dim), jnp.float32)
    h2_minsg = jax.random.normal(ks[8], (n_nodes, hid_dim), jnp.float32)
    h1_dec = jax.random.normal(ks[9], (n_nodes, hid_dim), jnp.float32)
    h2_dec = jax.random.normal(ks[10], (n_nodes, hid_dim), jnp.float32)

    kk = jax.random.split(ks[11], 3)
    adj = (jax.random.uniform(kk[0], (n_nodes, n_nodes)) < 0.25).astype(jnp.float32)
    adj = jnp.maximum(adj, adj.T)
    deg = jnp.clip(adj.sum(1), 1.0, None)
    dinv = 1.0 / jnp.sqrt(deg)
    a_hat = adj * dinv[:, None] * dinv[None, :]      # sym-normalized adjacency
    h_recon = jax.random.normal(kk[1], (n_nodes, hid_dim), jnp.float32)
    mask_nodes = jnp.array([0, 3, 5, 7, 9, 11, 12, 15], jnp.int32)
    x_target = jax.random.normal(kk[2], (mask_nodes.shape[0], in_feats),
                                 jnp.float32)

    sample = {
        'p_link': (h_link, pos_u, pos_v, neg_u, neg_v),
        'p_ming': (pos_emb, neg_emb),
        'p_minsg': (h1_minsg, h2_minsg),
        'p_decor': (h1_dec, h2_dec),
        'p_recon': (h_recon, a_hat, mask_nodes, x_target),
    }
    opt = SimpleNamespace(temperature_minsg=0.5, decor_lamb=0.001)

    res = model.forward(sample, opt)
    for v in res.values():
        jax.block_until_ready(v)
    print("KERNEL_OK")
</pallas_src>

<mosaic_0001>
module attributes {stable_mosaic.version = 11 : i64} {
  func.func @_link_hidden_kernel(%arg0: i32, %arg1: memref<16x32xf32, #tpu.memory_space<vmem>>, %arg2: memref<32x16xbf16, #tpu.memory_space<vmem>>, %arg3: memref<1x16xf32, #tpu.memory_space<vmem>>, %arg4: memref<16x16xf32, #tpu.memory_space<vmem>>) attributes {dimension_semantics = [#tpu.dimension_semantics<parallel>], iteration_bounds = array<i64: 1>, scalar_prefetch = 0 : i64, scratch_operands = 0 : i64, tpu.core_type = #tpu.core_type<tc>, window_params = [{transform_indices = @transform_0, window_bounds = array<i64: 16, 32>}, {pipeline_mode = #tpu.pipeline_mode<synchronous>, transform_indices = @transform_1, window_bounds = array<i64: 32, 16>}, {pipeline_mode = #tpu.pipeline_mode<synchronous>, transform_indices = @transform_2, window_bounds = array<i64: 1, 16>}, {transform_indices = @transform_3, window_bounds = array<i64: 16, 16>}]} {
    %c0 = arith.constant 0 : index
    %c0_0 = arith.constant 0 : index
    %0 = vector.load %arg1[%c0, %c0_0] : memref<16x32xf32, #tpu.memory_space<vmem>>, vector<16x32xf32>
    %1 = arith.mulf %0, %0 : vector<16x32xf32>
    %cst = arith.constant dense<0.000000e+00> : vector<16xf32>
    %2 = vector.multi_reduction <add>, %1, %cst [1] : vector<16x32xf32> to vector<16xf32>
    %3 = vector.shape_cast %2 : vector<16xf32> to vector<16x1xf32>
    %cst_1 = arith.constant 1.000000e-24 : f32
    %4 = vector.broadcast %cst_1 : f32 to vector<16x1xf32>
    %5 = arith.maximumf %3, %4 : vector<16x1xf32>
    %6 = math.rsqrt %5 : vector<16x1xf32>
    %7 = vector.broadcast %6 : vector<16x1xf32> to vector<16x32xf32>
    %8 = arith.mulf %0, %7 : vector<16x32xf32>
    %9 = arith.truncf %8 : vector<16x32xf32> to vector<16x32xbf16>
    %c0_2 = arith.constant 0 : index
    %c0_3 = arith.constant 0 : index
    %10 = vector.load %arg2[%c0_2, %c0_3] : memref<32x16xbf16, #tpu.memory_space<vmem>>, vector<32x16xbf16>
    %cst_4 = arith.constant dense<0.000000e+00> : vector<16x16xf32>
    %11 = tpu.matmul %9, %10, %cst_4 {dimension_numbers = #tpu.dot_dimension_numbers<[1], [0], [0], [1], [0, 0, 1, 1], [], []>} : vector<16x32xbf16>, vector<32x16xbf16>, vector<16x16xf32> -> vector<16x16xf32>
    %c0_5 = arith.constant 0 : index
    %c0_6 = arith.constant 0 : index
    %12 = vector.load %arg3[%c0_5, %c0_6] : memref<1x16xf32, #tpu.memory_space<vmem>>, vector<1x16xf32>
    %13 = vector.broadcast %12 : vector<1x16xf32> to vector<16x16xf32>
    %14 = arith.addf %11, %13 : vector<16x16xf32>
    %cst_7 = arith.constant 0.000000e+00 : f32
    %15 = vector.broadcast %cst_7 : f32 to vector<16x16xf32>
    %16 = arith.maximumf %14, %15 : vector<16x16xf32>
    %c0_8 = arith.constant 0 : index
    %c0_9 = arith.constant 0 : index
    %17 = vector.load %arg4[%c0_8, %c0_9] : memref<16x16xf32, #tpu.memory_space<vmem>>, vector<16x16xf32>
    tpu.vector_store %arg4[%c0_8, %c0_9], %16 {strides = array<i32>} : memref<16x16xf32, #tpu.memory_space<vmem>>, vector<16x16xf32>,
    return
  }
  func.func @transform_0(%arg0: i32) -> (i32, i32) {
    %c0_i32 = arith.constant 0 : i32
    %c0_i32_0 = arith.constant 0 : i32
    return %arg0, %c0_i32 : i32, i32
  }
  func.func @transform_1(%arg0: i32) -> (i32, i32) {
    %c0_i32 = arith.constant 0 : i32
    %c0_i32_0 = arith.constant 0 : i32
    %c0_i32_1 = arith.constant 0 : i32
    return %c0_i32, %c0_i32_0 : i32, i32
  }
  func.func @transform_2(%arg0: i32) -> (i32, i32) {
    %c0_i32 = arith.constant 0 : i32
    %c0_i32_0 = arith.constant 0 : i32
    %c0_i32_1 = arith.constant 0 : i32
    return %c0_i32, %c0_i32_0 : i32, i32
  }
  func.func @transform_3(%arg0: i32) -> (i32, i32) {
    %c0_i32 = arith.constant 0 : i32
    %c0_i32_0 = arith.constant 0 : i32
    return %arg0, %c0_i32 : i32, i32
  }
}

</mosaic_0001>

<llo_original>
// kernel: tpu_custom_call.1
$region0: #{tpu_custom_call.1}
  #allocation0 [shape = 'u32[]', space=smem, size = 0x4, offset = 0x4, fixed_abs, tag = 'smem constant byte address 0x4 - core index']
  #allocation1 [shape = 'u32[144,128]{1,0:T(1,128)}', space=vmem, size = 0x12000, scoped, tag = 'internal scratch']
  %s0 = inlined_call_operand.vmem [shape: f32[16,32], index: 0, kind: input, shape index: {}]
  %s1 = inlined_call_operand.vmem [shape: bf16[32,16], index: 1, kind: input, shape index: {}]
  %s2 = inlined_call_operand.vmem [shape: f32[1,16], index: 2, kind: input, shape index: {}]
  %s3 = inlined_call_operand.hbm [shape: f32[16,16], index: 3, kind: output, shape index: {}]
  %s4 = sld [smem:[#allocation0]]
  $region22: #{tpu_custom_call.1} parent=0
    _
  %s6 = ssub.s32 1, %s4
  %s7 = scalar_select 0, %s6, %s4
  $region1: #{tpu_custom_call.1} parent=0
    #allocation2 [shape = 'u8[8192]{0}', space=vmem, size = 0x2000, scoped, tag = 'output window, operand 0, single buffered']
    #allocation3 [shape = 's32[1]{0}', space=sflag, size = 0x4, scoped, tag = 'scoped memory for tpu_custom_call.1']
    %8 = vsyncpa [#allocation3], 0
    // Predicated region
    $region2: #{tpu_custom_call.1} parent=1 // pred_check
      _
    $region3: #{tpu_custom_call.1} parent=1 // pred_check_branch
      %10 = sbr.rel (0) target = $region5
    $region4: #{tpu_custom_call.1} parent=1 // pred_region
      _
    $region5: #{tpu_custom_call.1} parent=1 // pred_fallthru
      _
    // Predicated region
    $region6: #{tpu_custom_call.1} parent=1 // pred_check
      _
    $region7: #{tpu_custom_call.1} parent=1 // pred_check_branch
      %12 = sbr.rel (0) target = $region9
    $region8: #{tpu_custom_call.1} parent=1 // pred_region
      _
    $region9: #{tpu_custom_call.1} parent=1 // pred_fallthru
      _
    // Predicated region
    $region10: #{tpu_custom_call.1} parent=1 // pred_check
      _
    $region11: #{tpu_custom_call.1} parent=1 // pred_check_branch
      %14 = sbr.rel (0) target = $region13
    $region12: #{tpu_custom_call.1} parent=1 // pred_region
      _
    $region13: #{tpu_custom_call.1} parent=1 // pred_fallthru
      _
    %v16 = vld [vmem:[%s0] sm:$0xff]
    %v17 = vld [vmem:[%s0 + $0x8] sm:$0xff]
    %v18 = vmul.f32 %v16, %v16
    %v19 = vmul.f32 %v17, %v17
    %vm20 = vcmask 261120
    %v21 = vsel %vm20, %v18, 0.0
    %22 = vadd.xlane.f32.xlu0 %v21
    %v23 = vpop.xlane.xlu0 %22
    %v24 = vsel %vm20, %v19, 0.0
    %25 = vadd.xlane.f32.xlu0 %v24
    %v26 = vpop.xlane.xlu0 %25
    %v27 = vmax.f32 %v23, 1e-24
    %v28 = vmax.f32 %v26, 1e-24
    %v29 = vrsqrt.pop %v27
    %v30 = vrsqrt.pop %v28
    %v31 = vmul.f32 %v16, %v29
    %v32 = vmul.f32 %v17, %v30
    %v33 = vpack.c.bf16 %v32, %v31
    %v34 = vld [vmem:[%s1] sm:$0xf]
    %v35 = vld [vmem:[%s1 + $0x4] sm:$0xf]
    %v36 = vld [vmem:[%s1 + $0x8] sm:$0xf]
    %v37 = vld [vmem:[%s1 + $0xc] sm:$0xf]
    %v38 = vld [vmem:[%s2] sm:$0x1]
    %v40 = vlaneseq
    %v41 = vshrl.u32 %v40, 7
    %v42 = vsub.s32 0, %v41
    %v43 = vrot.slane %v38, %v42
    %v49 = vunpack.c.l.b16 %v34
    %v50 = vunpack.c.l.b16 %v35
    %v51 = vunpack.c.l.b16 %v36
    %v52 = vunpack.c.l.b16 %v37
    %v53 = vpack.c.b16 %v50, %v49
    %v54 = vpack.c.b16 %v52, %v51
    %v58 = vsel %vm20, %v33, 0
    %60 = vmatprep.subr.bf16.mxu0 0
    %61 = vmatpush1.bf16.msra.mxu0 0
    %62 = vmatprep.subr.bf16.mxu0 0
    %63 = vmatpush1.bf16.msra.mxu0 0
    %64 = vmatprep.subr.bf16.mxu0 0
    %65 = vmatpush1.bf16.msra.mxu0 0
    %66 = vmatprep.subr.bf16.mxu0 0
    %67 = vmatpush1.bf16.msra.mxu0 0
    %68 = vmatprep.subr.bf16.mxu0 0
    %69 = vmatpush1.bf16.msra.mxu0 0
    %70 = vmatprep.subr.bf16.mxu0 0
    %71 = vmatpush1.bf16.msra.mxu0 0
    %72 = vmatprep.subr.bf16.mxu0 0
    %73 = vmatpush1.bf16.msra.mxu0 %v54
    %74 = vmatprep.subr.bf16.mxu0 0
    %75 = vmatpush1.bf16.msra.mxu0 %v53
    %76 = vmatprep.subr.bf16.mxu0 0
    %77 = vmatpush2.bf16.msra.mxu0 0
    %78 = vmatprep.subr.bf16.mxu0 0
    %79 = vmatpush2.bf16.msra.mxu0 0
    %80 = vmatprep.subr.bf16.mxu0 0
    %81 = vmatpush2.bf16.msra.mxu0 0
    %82 = vmatprep.subr.bf16.mxu0 0
    %83 = vmatpush2.bf16.msra.mxu0 0
    %84 = vmatprep.subr.bf16.mxu0 0
    %85 = vmatpush2.bf16.msra.mxu0 0
    %86 = vmatprep.subr.bf16.mxu0 0
    %87 = vmatpush2.bf16.msra.mxu0 0
    %88 = vmatprep.subr.bf16.mxu0 0
    %89 = vmatpush2.bf16.msra.mxu0 0
    %90 = vmatprep.subr.bf16.mxu0 0
    %91 = vmatpush2.bf16.msra.mxu0 0
    %92 = vmatprep.mubr.bf16.mxu0 0
    %93 = vmatmul.mubr.bf16.gmra.mxu0 %v58
    %v94 = vpop.f32.mrf.mxu0
    %v95 = vadd.f32 %v43, %v94
    %v96 = vpop.f32.mrf.mxu0
    %v97 = vpop.f32.mrf.mxu0
    %v98 = vadd.f32 %v43, %v97
    %v99 = vpop.f32.mrf.mxu0
    %100 = vdwg.mxu0
    %v101 = vmax.f32 %v95, 0.0
    %v102 = vmax.f32 %v98, 0.0
    %vm103 = vcmask 130048
    %104 = vst.msk [vmem:[#allocation2] sm:$0xff] %vm103, %v101
    %105 = vst.msk [vmem:[#allocation2 + $0x8] sm:$0xff] %vm103, %v102
    // Predicated region
    $region14: #{tpu_custom_call.1} parent=1 // pred_check
      _
    $region15: #{tpu_custom_call.1} parent=1 // pred_check_branch
      %107 = sbr.rel (0) target = $region17
    $region16: #{tpu_custom_call.1} parent=1 // pred_region
      %s109 = ssub.s32 256, 256
      %110 = vsyncadd [#allocation3], %s109
      %s111 = sshll.u32 [#allocation2], 4
      %s112 = int_to_ptr.vmem [resolvable:$true] %s111
      %117 = dma.vmem_to_hbm [thread:$0]  %s112, 256, %s3, [#allocation3], 128, 128, 8
    $region17: #{tpu_custom_call.1} parent=1 // pred_fallthru
      _
    // Predicated region
    $region18: #{tpu_custom_call.1} parent=1 // pred_check
      _
    $region19: #{tpu_custom_call.1} parent=1 // pred_check_branch
      %119 = sbr.rel (0) target = $region21
    $region20: #{tpu_custom_call.1} parent=1 // pred_region
      %120 = dma.done [#allocation3], 256
    $region21: #{tpu_custom_call.1} parent=1 // pred_fallthru
      _
    %121 = vsyncpa [#allocation3], 1

</llo_original>
